<compile_context>
chip_gen: v7x
topology: tpu7x:2x2x1
jax: 0.10.0
libtpu: 0.0.40
codegen_flags: <defaults>
</compile_context>

<pallas_src>
import functools

import jax
import jax.numpy as jnp
from jax.experimental import pallas as pl
from jax.experimental.pallas import tpu as pltpu

# Packed parameter slab layout (rows x 128 lanes, f32):
#   rows   0:8    -> W1 padded   ([4,64] placed in rows 0:4; rest zero)
#   rows   8:16   -> bias block  (row 8 = b1 padded to 128, row 9 = [b2|b3|0...])
#   rows  16:144  -> fused head W23 ([64,2]=w2 and [64,1]=w3 in a [128,128]; rest zero)
SLAB_ROWS = 144
VALUE_COL = 2  # out[:, 0:2] = policy probs, out[:, 2] = value


def actor_critic_kernel(x_ref, p_ref, out_ref, *, valid_b):
    x = x_ref[...]                                   # [Bp, 4]
    w1 = p_ref[0:4, :]                               # [4, 128]   (cols 64..127 zero)
    b1 = p_ref[8:9, :]                               # [1, 128]
    b23 = p_ref[9:10, :]                             # [1, 128]
    w23 = p_ref[16:144, :]                           # [128, 128] (rows 64..127 zero)

    # Hidden layer: h = relu(x @ W1 + b1)            [Bp, 128]  (cols 64..127 stay 0)
    # K=4 matmul; MXU pads the contraction dim internally.
    h = jnp.maximum(
        jnp.dot(x, w1, preferred_element_type=jnp.float32) + b1, 0.0)

    # Fused heads: one lane-dense matmul for policy logits + value.
    logits = jnp.dot(h, w23, preferred_element_type=jnp.float32) + b23   # [Bp, 128]

    # Softmax over dim=0 (batch axis), per column — matches the torch reference.
    # Padded batch rows (if any) are excluded from the max/sum via -inf.
    bp = logits.shape[0]
    if valid_b < bp:
        row = jax.lax.broadcasted_iota(jnp.int32, logits.shape, dimension=0)
        masked = jnp.where(row < valid_b, logits, -jnp.inf)
    else:
        masked = logits
    m = jnp.max(masked, axis=0, keepdims=True)       # [1, 128]
    e = jnp.exp(masked - m)
    denom = jnp.sum(e, axis=0, keepdims=True)        # [1, 128]
    probs = e / denom                                # exact divide (free here)

    # Columns 3..127 get a meaningless softmax and the value column's softmax
    # is discarded — harmless: only columns 0..2 are ever read by the wrapper.
    col = jax.lax.broadcasted_iota(jnp.int32, logits.shape, dimension=1)
    out_ref[...] = jnp.where(col == VALUE_COL, logits, probs)   # one unmasked store


def pack_params(w1, b1, w2, b2, w3, b3):
    """Pack all parameters into one tile-aligned [144, 128] f32 VMEM slab.

    Torch stores Linear weight as [out, in]; here weights are already [in, out].
    """
    slab = jnp.zeros((SLAB_ROWS, 128), jnp.float32)
    slab = slab.at[0:4, 0:64].set(w1)                       # fc1 weight  [4, 64]
    slab = slab.at[8, 0:64].set(b1.reshape(64))             # fc1 bias
    slab = slab.at[9, 0:2].set(b2.reshape(2))               # fc2 bias
    slab = slab.at[9, 2].set(b3.reshape(()))                # fc3 bias
    slab = slab.at[16:80, 0:2].set(w2)                      # fc2 weight  [64, 2]
    slab = slab.at[16:80, 2:3].set(w3)                      # fc3 weight  [64, 1]
    return slab


def _round_up(n, m):
    return ((n + m - 1) // m) * m


@jax.jit
def actor_critic_rollout(x, params_slab):
    """x: [N, B, 4] f32 — N independent forward passes (e.g. an RL rollout).

    Returns (policy [N, B, 2], value [N, B, 1]).  The [144,128] parameter slab
    is DMA'd once and stays VMEM-resident across the grid; the grid axis is
    parallel so v7x's two TensorCores split the steps.
    """
    N, B, _ = x.shape
    Bp = _round_up(B, 8)
    if Bp != B:  # static Python branch: no-op HLO when B is already aligned
        x = jnp.pad(x, ((0, 0), (0, Bp - B), (0, 0)))

    kernel = functools.partial(actor_critic_kernel, valid_b=B)
    out = pl.pallas_call(
        kernel,
        out_shape=jax.ShapeDtypeStruct((N, Bp, 128), jnp.float32),  # lane-dense slab
        grid_spec=pltpu.PrefetchScalarGridSpec(
            num_scalar_prefetch=0,
            grid=(N,),
            in_specs=[
                pl.BlockSpec((None, Bp, 4), lambda n: (n, 0, 0)),        # per-step x
                pl.BlockSpec((SLAB_ROWS, 128), lambda n: (0, 0)),        # resident params
            ],
            out_specs=pl.BlockSpec((None, Bp, 128), lambda n: (n, 0, 0)),
        ),
        compiler_params=pltpu.CompilerParams(
            dimension_semantics=("parallel",)),
    )(x, params_slab)

    if Bp != B:
        out = out[:, :B, :]
    # Split inside the same jit (consumer-side slice; already fused).
    return out[..., 0:2], out[..., VALUE_COL:VALUE_COL + 1]


@jax.jit
def actor_critic_forward(x, params_slab):
    """Single-call path.  x: [B, 4] f32.  Returns (policy [B, 2], value [B, 1])."""
    policy, value = actor_critic_rollout(x[None], params_slab)
    return policy[0], value[0]


def init_params(key):
    """Deterministic synthetic parameters with the module's shapes ([in, out])."""
    k1, k2, k3, k4, k5, k6 = jax.random.split(key, 6)
    w1 = jax.random.normal(k1, (4, 64), jnp.float32) * 0.1    # fc1: Linear(4, 64)
    b1 = jax.random.normal(k2, (1, 64), jnp.float32) * 0.1
    w2 = jax.random.normal(k3, (64, 2), jnp.float32) * 0.1    # fc2: Linear(64, 2)
    b2 = jax.random.normal(k4, (1, 2), jnp.float32) * 0.1
    w3 = jax.random.normal(k5, (64, 1), jnp.float32) * 0.1    # fc3: Linear(64, 1)
    b3 = jax.random.normal(k6, (1, 1), jnp.float32) * 0.1
    return w1, b1, w2, b2, w3, b3


def reference_forward(x, w1, b1, w2, b2, w3, b3):
    h = jnp.maximum(x @ w1 + b1, 0.0)
    logits = h @ w2 + b2
    policy = jax.nn.softmax(logits, axis=0)   # dim=0, matching the torch code
    value = h @ w3 + b3
    return policy, value


if __name__ == "__main__":
    key = jax.random.PRNGKey(0)
    kx, kp = jax.random.split(key)

    N, B = 4, 8  # small rollout of CartPole-like states (state dim = 4)
    x = jax.random.normal(kx, (N, B, 4), jnp.float32)
    params = init_params(kp)
    slab = pack_params(*params)

    # Rollout path: grid=(N,), params slab VMEM-resident across steps.
    policy, value = jax.block_until_ready(actor_critic_rollout(x, slab))
    assert policy.shape == (N, B, 2) and value.shape == (N, B, 1)

    # Sanity check against a pure-JAX reference (softmax over dim=0 per step).
    ref_policy, ref_value = jax.vmap(lambda xb: reference_forward(xb, *params))(x)
    assert jnp.allclose(policy, ref_policy, atol=1e-4, rtol=1e-4)
    assert jnp.allclose(value, ref_value, atol=1e-5, rtol=1e-5)

    # Single-call path reuses the same kernel with N=1.
    p1, v1 = jax.block_until_ready(actor_critic_forward(x[0], slab))
    assert p1.shape == (B, 2) and v1.shape == (B, 1)
    assert jnp.allclose(p1, ref_policy[0], atol=1e-4, rtol=1e-4)
    assert jnp.allclose(v1, ref_value[0], atol=1e-5, rtol=1e-5)

    print("KERNEL_OK")
</pallas_src>

<mosaic_0001>
module attributes {stable_mosaic.version = 11 : i64} {
  func.func @actor_critic_kernel(%arg0: i32, %arg1: memref<1x8x4xf32, #tpu.memory_space<vmem>>, %arg2: memref<144x128xf32, #tpu.memory_space<vmem>>, %arg3: memref<1x8x128xf32, #tpu.memory_space<vmem>>) attributes {dimension_semantics = [#tpu.dimension_semantics<parallel>], iteration_bounds = array<i64: 4>, scalar_prefetch = 0 : i64, scratch_operands = 0 : i64, tpu.core_type = #tpu.core_type<tc>, window_params = [{transform_indices = @transform_0, window_bounds = array<i64: 1, 8, 4>}, {pipeline_mode = #tpu.pipeline_mode<synchronous>, transform_indices = @transform_1, window_bounds = array<i64: 144, 128>}, {transform_indices = @transform_2, window_bounds = array<i64: 1, 8, 128>}]} {
    %c0 = arith.constant 0 : index
    %c0_0 = arith.constant 0 : index
    %c0_1 = arith.constant 0 : index
    %0 = vector.load %arg1[%c0, %c0_0, %c0_1] : memref<1x8x4xf32, #tpu.memory_space<vmem>>, vector<1x8x4xf32>
    %1 = vector.shape_cast %0 : vector<1x8x4xf32> to vector<8x4xf32>
    %c0_2 = arith.constant 0 : index
    %c0_3 = arith.constant 0 : index
    %2 = vector.load %arg2[%c0_2, %c0_3] : memref<144x128xf32, #tpu.memory_space<vmem>>, vector<4x128xf32>
    %c8 = arith.constant 8 : index
    %c0_4 = arith.constant 0 : index
    %3 = vector.load %arg2[%c8, %c0_4] : memref<144x128xf32, #tpu.memory_space<vmem>>, vector<1x128xf32>
    %c9 = arith.constant 9 : index
    %c0_5 = arith.constant 0 : index
    %4 = vector.load %arg2[%c9, %c0_5] : memref<144x128xf32, #tpu.memory_space<vmem>>, vector<1x128xf32>
    %c16 = arith.constant 16 : index
    %c0_6 = arith.constant 0 : index
    %5 = vector.load %arg2[%c16, %c0_6] : memref<144x128xf32, #tpu.memory_space<vmem>>, vector<128x128xf32>
    %cst = arith.constant dense<0.000000e+00> : vector<8x128xf32>
    %6 = tpu.matmul %1, %2, %cst {dimension_numbers = #tpu.dot_dimension_numbers<[1], [0], [0], [1], [0, 0, 1, 1], [], []>} : vector<8x4xf32>, vector<4x128xf32>, vector<8x128xf32> -> vector<8x128xf32>
    %7 = vector.broadcast %3 : vector<1x128xf32> to vector<8x128xf32>
    %8 = arith.addf %6, %7 : vector<8x128xf32>
    %cst_7 = arith.constant 0.000000e+00 : f32
    %9 = vector.broadcast %cst_7 : f32 to vector<8x128xf32>
    %10 = arith.maximumf %8, %9 : vector<8x128xf32>
    %cst_8 = arith.constant dense<0.000000e+00> : vector<8x128xf32>
    %11 = tpu.matmul %10, %5, %cst_8 {dimension_numbers = #tpu.dot_dimension_numbers<[1], [0], [0], [1], [0, 0, 1, 1], [], []>} : vector<8x128xf32>, vector<128x128xf32>, vector<8x128xf32> -> vector<8x128xf32>
    %12 = vector.broadcast %4 : vector<1x128xf32> to vector<8x128xf32>
    %13 = arith.addf %11, %12 : vector<8x128xf32>
    %cst_9 = arith.constant dense<0xFF800000> : vector<128xf32>
    %14 = vector.multi_reduction <maximumf>, %13, %cst_9 [0] : vector<8x128xf32> to vector<128xf32>
    %15 = vector.shape_cast %14 : vector<128xf32> to vector<1x128xf32>
    %16 = vector.broadcast %15 : vector<1x128xf32> to vector<8x128xf32>
    %17 = arith.subf %13, %16 : vector<8x128xf32>
    %18 = math.exp %17 : vector<8x128xf32>
    %cst_10 = arith.constant dense<0.000000e+00> : vector<128xf32>
    %19 = vector.multi_reduction <add>, %18, %cst_10 [0] : vector<8x128xf32> to vector<128xf32>
    %20 = vector.shape_cast %19 : vector<128xf32> to vector<1x128xf32>
    %21 = vector.broadcast %20 : vector<1x128xf32> to vector<8x128xf32>
    %22 = arith.divf %18, %21 : vector<8x128xf32>
    %23 = tpu.iota {dimensions = array<i32: 1>} : vector<8x128xi32>
    %c2_i32 = arith.constant 2 : i32
    %24 = vector.broadcast %c2_i32 : i32 to vector<8x128xi32>
    %25 = arith.cmpi eq, %23, %24 : vector<8x128xi32>
    %26 = arith.select %25, %13, %22 : vector<8x128xi1>, vector<8x128xf32>
    %c0_11 = arith.constant 0 : index
    %c0_12 = arith.constant 0 : index
    %c0_13 = arith.constant 0 : index
    %27 = vector.load %arg3[%c0_11, %c0_12, %c0_13] : memref<1x8x128xf32, #tpu.memory_space<vmem>>, vector<1x8x128xf32>
    %28 = vector.shape_cast %27 : vector<1x8x128xf32> to vector<8x128xf32>
    %29 = vector.shape_cast %26 : vector<8x128xf32> to vector<1x8x128xf32>
    tpu.vector_store %arg3[%c0_11, %c0_12, %c0_13], %29 {strides = array<i32>} : memref<1x8x128xf32, #tpu.memory_space<vmem>>, vector<1x8x128xf32>,
    return
  }
  func.func @transform_0(%arg0: i32) -> (i32, i32, i32) {
    %c0_i32 = arith.constant 0 : i32
    %c0_i32_0 = arith.constant 0 : i32
    %c0_i32_1 = arith.constant 0 : i32
    return %arg0, %c0_i32, %c0_i32_0 : i32, i32, i32
  }
  func.func @transform_1(%arg0: i32) -> (i32, i32) {
    %c0_i32 = arith.constant 0 : i32
    %c0_i32_0 = arith.constant 0 : i32
    %c0_i32_1 = arith.constant 0 : i32
    return %c0_i32, %c0_i32_0 : i32, i32
  }
  func.func @transform_2(%arg0: i32) -> (i32, i32, i32) {
    %c0_i32 = arith.constant 0 : i32
    %c0_i32_0 = arith.constant 0 : i32
    %c0_i32_1 = arith.constant 0 : i32
    return %arg0, %c0_i32, %c0_i32_0 : i32, i32, i32
  }
}

</mosaic_0001>

<llo_original>
// kernel: actor_critic_rollout.1
$region0: #{actor_critic_rollout.1}
  #allocation0 [shape = 'u32[]', space=smem, size = 0x4, offset = 0x4, fixed_abs, tag = 'smem constant byte address 0x4 - core index']
  #allocation1 [shape = 'u32[144,128]{1,0:T(1,128)}', space=vmem, size = 0x12000, scoped, tag = 'internal scratch']
  %s0 = inlined_call_operand.vmem [shape: f32[4,8,4], index: 0, kind: input, shape index: {}]
  %s1 = inlined_call_operand.hbm [shape: f32[144,128], index: 1, kind: input, shape index: {}]
  %s2 = inlined_call_operand.vmem [shape: f32[4,8,128], index: 2, kind: output, shape index: {}]
  %s3 = sld [smem:[#allocation0]]
  $region45: #{actor_critic_rollout.1} parent=0
    _
  %s5 = ssub.s32 1, %s3
  %s6 = scalar_select 0, %s5, %s3
  $region1: #{actor_critic_rollout.1} parent=0
    #allocation2 [shape = 'u8[73728]{0}', space=vmem, size = 0x12000, scoped, tag = 'input window, operand 1, single buffered']
    #allocation3 [shape = 's32[2]{0}', space=sflag, size = 0x8, scoped, tag = 'scoped memory for actor_critic_rollout.1']
    %7 = vsyncpa [#allocation3], 0
    loop: start=0, step=1, limit=6
    $region2: #{actor_critic_rollout.1} parent=1 // loop_pre_header
      _
    $region3: #{actor_critic_rollout.1} parent=1 // loop_header
      %s9 = sphi 0, %s13
      %p10 = scmp.ge.s32.totalorder %s9, 6
      %s19 = sphi 0, %s21
      %s22 = sphi 0, %s19
      %s23 = sphi 0, %s22
      %s39 = sphi 0, %s23
      %s43 = sphi 0, %s43
      %s45 = sphi 0, %s43
      %s46 = sphi 0, %s45
      %s60 = sphi 0, %s46
      %s66 = sphi 0, %s68
      %s69 = sphi 0, %s66
      %s70 = sphi 0, %s69
      %s86 = sphi 0, %s70
    $region4: #{actor_critic_rollout.1} parent=1 // loop_header_branch
      %12 = sbr.rel (%p10) target = $region8
    $region5: #{actor_critic_rollout.1} parent=1 // loop_body
      %s14 = ssub.s32 %s9, 1
      %s15 = ssub.s32 %s9, 2
      %s16 = sadd.s32 %s9, 1
      %s17 = ssub.s32 %s9, %s16
      %p18 = scmp.eq.s32.totalorder %s17, 0
      %s20 = sadd.s32 %s19, 1
      %s21 = scalar_select %p18, %s19, %s20
      %p24 = pneg %p18
      %p25 = scmp.eq.s32.totalorder %s9, 3
      %p26 = por %p24, %p25
      %p27 = scmp.ne.s32.totalorder %s19, %s22
      %p28 = scmp.eq.s32.totalorder %s9, 0
      %p29 = por %p27, %p28
      %p30 = scmp.ne.s32.totalorder %s19, %s22
      %p31 = scmp.eq.s32.totalorder %s14, 3
      %p32 = por %p30, %p31
      %p33 = scmp.ne.s32.totalorder %s22, %s23
      %p34 = scmp.eq.s32.totalorder %s14, 0
      %p35 = por %p33, %p34
      %p36 = scmp.ne.s32.totalorder %s22, %s23
      %p37 = scmp.eq.s32.totalorder %s15, 3
      %p38 = por %p36, %p37
      %p40 = scmp.ne.s32.totalorder %s23, %s39
      %p41 = scmp.eq.s32.totalorder %s15, 0
      %p42 = por %p40, %p41
      %s44 = sadd.s32 %s43, 1
      %p47 = scmp.eq.s32.totalorder %s9, 3
      %p48 = scmp.ne.s32.totalorder %s43, %s45
      %p49 = scmp.eq.s32.totalorder %s9, 0
      %p50 = por %p48, %p49
      %p51 = scmp.ne.s32.totalorder %s43, %s45
      %p52 = scmp.eq.s32.totalorder %s14, 3
      %p53 = por %p51, %p52
      %p54 = scmp.ne.s32.totalorder %s45, %s46
      %p55 = scmp.eq.s32.totalorder %s14, 0
      %p56 = por %p54, %p55
      %p57 = scmp.ne.s32.totalorder %s45, %s46
      %p58 = scmp.eq.s32.totalorder %s15, 3
      %p59 = por %p57, %p58
      %p61 = scmp.ne.s32.totalorder %s46, %s60
      %p62 = scmp.eq.s32.totalorder %s15, 0
      %p63 = por %p61, %p62
      %s64 = ssub.s32 %s9, %s16
      %p65 = scmp.eq.s32.totalorder %s64, 0
      %s67 = sadd.s32 %s66, 1
      %s68 = scalar_select %p65, %s66, %s67
      %p71 = pneg %p65
      %p72 = scmp.eq.s32.totalorder %s9, 3
      %p73 = por %p71, %p72
      %p74 = scmp.ne.s32.totalorder %s66, %s69
      %p75 = scmp.eq.s32.totalorder %s9, 0
      %p76 = por %p74, %p75
      %p77 = scmp.ne.s32.totalorder %s66, %s69
      %p78 = scmp.eq.s32.totalorder %s14, 3
      %p79 = por %p77, %p78
      %p80 = scmp.ne.s32.totalorder %s69, %s70
      %p81 = scmp.eq.s32.totalorder %s14, 0
      %p82 = por %p80, %p81
      %p83 = scmp.ne.s32.totalorder %s69, %s70
      %p84 = scmp.eq.s32.totalorder %s15, 3
      %p85 = por %p83, %p84
      %p87 = scmp.ne.s32.totalorder %s70, %s86
      %p88 = scmp.eq.s32.totalorder %s15, 0
      %p89 = por %p87, %p88
      %p90 = scmp.le.s32.totalorder 1, %s9
      %p91 = scmp.lt.s32.totalorder %s9, 5
      %p92 = pnand %p90, %p91
      %p93 = pneg %p92
      // Predicated region
      $region9: #{actor_critic_rollout.1} parent=5 // pred_check
        _
      $region10: #{actor_critic_rollout.1} parent=5 // pred_check_branch
        %95 = sbr.rel (%p92) target = $region12
      $region11: #{actor_critic_rollout.1} parent=5 // pred_region
        %s96 = ssub.s32 %s9, 1
        // Predicated region
        $region13: #{actor_critic_rollout.1} parent=11 // pred_check
          %p97 = pneg %p56
        $region14: #{actor_critic_rollout.1} parent=11 // pred_check_branch
          %99 = sbr.rel (%p97) target = $region16
        $region15: #{actor_critic_rollout.1} parent=11 // pred_region
          %s101 = ssub.s32 2304, 2304
          %102 = vsyncadd [#allocation3], %s101
          %s103 = sshll.u32 [#allocation2], 4
          %s104 = int_to_ptr.vmem [resolvable:$true] %s103
          %109 = dma.hbm_to_vmem [thread:$0]  %s1, 2304, %s104, [#allocation3], 128, 128, 8
        $region16: #{actor_critic_rollout.1} parent=11 // pred_fallthru
          _
      $region12: #{actor_critic_rollout.1} parent=5 // pred_fallthru
        _
      %p110 = scmp.lt.s32.totalorder %s9, 4
      // Predicated region
      $region17: #{actor_critic_rollout.1} parent=5 // pred_check
        %p111 = pneg %p110
      $region18: #{actor_critic_rollout.1} parent=5 // pred_check_branch
        %113 = sbr.rel (%p111) target = $region20
      $region19: #{actor_critic_rollout.1} parent=5 // pred_region
        // Predicated region
        $region21: #{actor_critic_rollout.1} parent=19 // pred_check
          %p114 = pneg %p29
        $region22: #{actor_critic_rollout.1} parent=19 // pred_check_branch
          %116 = sbr.rel (%p114) target = $region24
        $region23: #{actor_critic_rollout.1} parent=19 // pred_region
          %p117 = scmp.lt.s32.totalorder %s9, 3
          %s118 = scalar_select %p117, %s9, 3
          %s119 = smul.addr %s118, 8
          %s120 = scalar_lea.vmem %s0, %s119
        $region24: #{actor_critic_rollout.1} parent=19 // pred_fallthru
          _
      $region20: #{actor_critic_rollout.1} parent=5 // pred_fallthru
        _
      %p121 = scmp.le.s32.totalorder 1, %s9
      %p122 = scmp.lt.s32.totalorder %s9, 5
      %p123 = pnand %p121, %p122
      %p124 = pneg %p123
      // Predicated region
      $region25: #{actor_critic_rollout.1} parent=5 // pred_check
        _
      $region26: #{actor_critic_rollout.1} parent=5 // pred_check_branch
        %126 = sbr.rel (%p123) target = $region28
      $region27: #{actor_critic_rollout.1} parent=5 // pred_region
        %s127 = ssub.s32 %s9, 1
        // Predicated region
        $region29: #{actor_critic_rollout.1} parent=27 // pred_check
          %p128 = pneg %p56
        $region30: #{actor_critic_rollout.1} parent=27 // pred_check_branch
          %130 = sbr.rel (%p128) target = $region32
        $region31: #{actor_critic_rollout.1} parent=27 // pred_region
          %131 = dma.done [#allocation3], 2304
        $region32: #{actor_critic_rollout.1} parent=27 // pred_fallthru
          _
        %p132 = scmp.lt.s32.totalorder %s14, 3
        %s133 = scalar_select %p132, %s14, 3
        %s134 = smul.addr %s133, 8
        %s135 = scalar_lea.vmem %s0, %s134
        %p136 = pneg %p35
        %p137 = pneg %p32
        %p138 = pneg %p56
        %p139 = pneg %p53
        %p140 = pneg %p82
        %p141 = pneg %p79
        %p142 = scmp.lt.s32.totalorder %s14, 3
        %s143 = scalar_select %p142, %s14, 3
        %s144 = smul.addr %s143, 8
        %s145 = scalar_lea.vmem %s2, %s144
        %p146 = scmp.lt.s32.totalorder %s14, 3
        %s147 = scalar_select %p146, %s14, 3
        %s148 = smul.addr %s147, 8
        %s149 = scalar_lea.vmem %s0, %s148
        %p150 = scmp.lt.s32.totalorder %s14, 3
        %s151 = scalar_select %p150, %s14, 3
        %s152 = smul.addr %s151, 8
        %s153 = scalar_lea.vmem %s2, %s152
        %v154 = vld [vmem:[%s149] sm:$0xff]
        %v155 = vld [vmem:[#allocation2] sm:$0xf]
        %v156 = vld [vmem:[#allocation2 + $0x8] sm:$0x1]
        %v157 = vld [vmem:[#allocation2 + $0x9] sm:$0x1]
        %v158 = vld [vmem:[#allocation2 + $0x10] sm:$0xff]
        %v159 = vld [vmem:[#allocation2 + $0x18] sm:$0xff]
        %v160 = vld [vmem:[#allocation2 + $0x20] sm:$0xff]
        %v161 = vld [vmem:[#allocation2 + $0x28] sm:$0xff]
        %v162 = vld [vmem:[#allocation2 + $0x30] sm:$0xff]
        %v163 = vld [vmem:[#allocation2 + $0x38] sm:$0xff]
        %v164 = vld [vmem:[#allocation2 + $0x40] sm:$0xff]
        %v165 = vld [vmem:[#allocation2 + $0x48] sm:$0xff]
        %v166 = vld [vmem:[#allocation2 + $0x50] sm:$0xff]
        %v167 = vld [vmem:[#allocation2 + $0x58] sm:$0xff]
        %v168 = vld [vmem:[#allocation2 + $0x60] sm:$0xff]
        %v169 = vld [vmem:[#allocation2 + $0x68] sm:$0xff]
        %v170 = vld [vmem:[#allocation2 + $0x70] sm:$0xff]
        %v171 = vld [vmem:[#allocation2 + $0x78] sm:$0xff]
        %v172 = vld [vmem:[#allocation2 + $0x80] sm:$0xff]
        %v173 = vld [vmem:[#allocation2 + $0x88] sm:$0xff]
        %v174 = vlaneseq
        %v175 = vshrl.u32 %v174, 7
        %v176 = vsub.s32 0, %v175
        %v177 = vrot.slane %v156, %v176
        %vm178 = vcmask 31744
        %v180 = vsel %vm178, %v154, 0
        %vm182 = vcmask 1043456
        %v184 = vsel %vm182, %v155, 0
        %186 = vmatprep.subr.mxu0 0.0
        %187 = vmatpush1.msra.mxu0 %v184
        %188 = vmatprep.subr.mxu0 0.0
        %189 = vmatpush1.msra.mxu0 0.0
        %190 = vmatprep.subr.mxu0 0.0
        %191 = vmatpush1.msra.mxu0 0.0
        %192 = vmatprep.subr.mxu0 0.0
        %193 = vmatpush1.msra.mxu0 0.0
        %194 = vmatprep.subr.mxu0 0.0
        %195 = vmatpush1.msra.mxu0 0.0
        %196 = vmatprep.subr.mxu0 0.0
        %197 = vmatpush1.msra.mxu0 0.0
        %198 = vmatprep.subr.mxu0 0.0
        %199 = vmatpush1.msra.mxu0 0.0
        %200 = vmatprep.subr.mxu0 0.0
        %201 = vmatpush1.msra.mxu0 0.0
        %202 = vmatprep.subr.mxu0 0.0
        %203 = vmatpush1.msra.mxu0 0.0
        %204 = vmatprep.subr.mxu0 0.0
        %205 = vmatpush1.msra.mxu0 0.0
        %206 = vmatprep.subr.mxu0 0.0
        %207 = vmatpush1.msra.mxu0 0.0
        %208 = vmatprep.subr.mxu0 0.0
        %209 = vmatpush1.msra.mxu0 0.0
        %210 = vmatprep.subr.mxu0 0.0
        %211 = vmatpush1.msra.mxu0 0.0
        %212 = vmatprep.subr.mxu0 0.0
        %213 = vmatpush1.msra.mxu0 0.0
        %214 = vmatprep.subr.mxu0 0.0
        %215 = vmatpush1.msra.mxu0 0.0
        %216 = vmatprep.subr.mxu0 0.0
        %217 = vmatpush1.msra.mxu0 0.0
        %218 = vmatprep.subr.mxu0 0.0
        %219 = vmatpush1.msra.mxu0 0.0
        %220 = vmatprep.subr.mxu0 0.0
        %221 = vmatpush1.msra.mxu0 0.0
        %222 = vmatprep.subr.mxu0 0.0
        %223 = vmatpush1.msra.mxu0 0.0
        %224 = vmatprep.subr.mxu0 0.0
        %225 = vmatpush1.msra.mxu0 0.0
        %226 = vmatprep.subr.mxu0 0.0
        %227 = vmatpush1.msra.mxu0 0.0
        %228 = vmatprep.subr.mxu0 0.0
        %229 = vmatpush1.msra.mxu0 0.0
        %230 = vmatprep.subr.mxu0 0.0
        %231 = vmatpush1.msra.mxu0 0.0
        %232 = vmatprep.subr.mxu0 0.0
        %233 = vmatpush1.msra.mxu0 0.0
        %234 = vmatprep.subr.mxu0 0.0
        %235 = vmatpush1.msra.mxu0 0.0
        %236 = vmatprep.subr.mxu0 0.0
        %237 = vmatpush1.msra.mxu0 0.0
        %238 = vmatprep.subr.mxu0 0.0
        %239 = vmatpush1.msra.mxu0 0.0
        %240 = vmatprep.subr.mxu0 0.0
        %241 = vmatpush1.msra.mxu0 0.0
        %242 = vmatprep.subr.mxu0 0.0
        %243 = vmatpush1.msra.mxu0 0.0
        %244 = vmatprep.subr.mxu0 0.0
        %245 = vmatpush1.msra.mxu0 0.0
        %246 = vmatprep.subr.mxu0 0.0
        %247 = vmatpush1.msra.mxu0 0.0
        %248 = vmatprep.subr.mxu0 0.0
        %249 = vmatpush1.msra.mxu0 0.0
        %250 = vmatprep.mubr.f32.mxu0 0.0
        %251 = vmatmul.mubr.f32.gmra.mrb[0].mxu0 %v180
        %v252 = vpop.f32.mrb[0].mxu0
        %v253 = vadd.f32 %v177, %v252
        %v254 = vpop.f32.mrb[0].mxu0
        %255 = vdwg.mxu0
        %v256 = vmax.f32 %v253, 0.0
        %v257 = vlaneseq
        %v258 = vshrl.u32 %v257, 7
        %v259 = vsub.s32 0, %v258
        %v260 = vrot.slane %v157, %v259
        %261 = vmatprep.subr.mxu0 0.0
        %262 = vmatpush1.msra.mxu0 %v158
        %263 = vmatprep.subr.mxu0 0.0
        %264 = vmatpush1.msra.mxu0 %v159
        %265 = vmatprep.subr.mxu0 0.0
        %266 = vmatpush1.msra.mxu0 %v160
        %267 = vmatprep.subr.mxu0 0.0
        %268 = vmatpush1.msra.mxu0 %v161
        %269 = vmatprep.subr.mxu0 0.0
        %270 = vmatpush1.msra.mxu0 %v162
        %271 = vmatprep.subr.mxu0 0.0
        %272 = vmatpush1.msra.mxu0 %v163
        %273 = vmatprep.subr.mxu0 0.0
        %274 = vmatpush1.msra.mxu0 %v164
        %275 = vmatprep.subr.mxu0 0.0
        %276 = vmatpush1.msra.mxu0 %v165
        %277 = vmatprep.subr.mxu0 0.0
        %278 = vmatpush1.msra.mxu0 %v166
        %279 = vmatprep.subr.mxu0 0.0
        %280 = vmatpush1.msra.mxu0 %v167
        %281 = vmatprep.subr.mxu0 0.0
        %282 = vmatpush1.msra.mxu0 %v168
        %283 = vmatprep.subr.mxu0 0.0
        %284 = vmatpush1.msra.mxu0 %v169
        %285 = vmatprep.subr.mxu0 0.0
        %286 = vmatpush1.msra.mxu0 %v170
        %287 = vmatprep.subr.mxu0 0.0
        %288 = vmatpush1.msra.mxu0 %v171
        %289 = vmatprep.subr.mxu0 0.0
        %290 = vmatpush1.msra.mxu0 %v172
        %291 = vmatprep.subr.mxu0 0.0
        %292 = vmatpush1.msra.mxu0 %v173
        %293 = vmatprep.subr.mxu0 0.0
        %294 = vmatpush1.msra.mxu0 0.0
        %295 = vmatprep.subr.mxu0 0.0
        %296 = vmatpush1.msra.mxu0 0.0
        %297 = vmatprep.subr.mxu0 0.0
        %298 = vmatpush1.msra.mxu0 0.0
        %299 = vmatprep.subr.mxu0 0.0
        %300 = vmatpush1.msra.mxu0 0.0
        %301 = vmatprep.subr.mxu0 0.0
        %302 = vmatpush1.msra.mxu0 0.0
        %303 = vmatprep.subr.mxu0 0.0
        %304 = vmatpush1.msra.mxu0 0.0
        %305 = vmatprep.subr.mxu0 0.0
        %306 = vmatpush1.msra.mxu0 0.0
        %307 = vmatprep.subr.mxu0 0.0
        %308 = vmatpush1.msra.mxu0 0.0
        %309 = vmatprep.subr.mxu0 0.0
        %310 = vmatpush1.msra.mxu0 0.0
        %311 = vmatprep.subr.mxu0 0.0
        %312 = vmatpush1.msra.mxu0 0.0
        %313 = vmatprep.subr.mxu0 0.0
        %314 = vmatpush1.msra.mxu0 0.0
        %315 = vmatprep.subr.mxu0 0.0
        %316 = vmatpush1.msra.mxu0 0.0
        %317 = vmatprep.subr.mxu0 0.0
        %318 = vmatpush1.msra.mxu0 0.0
        %319 = vmatprep.subr.mxu0 0.0
        %320 = vmatpush1.msra.mxu0 0.0
        %321 = vmatprep.subr.mxu0 0.0
        %322 = vmatpush1.msra.mxu0 0.0
        %323 = vmatprep.subr.mxu0 0.0
        %324 = vmatpush1.msra.mxu0 0.0
        %325 = vmatprep.mubr.f32.mxu0 0.0
        %326 = vmatmul.mubr.f32.gmra.mrb[0].mxu0 %v256
        %v327 = vpop.f32.mrb[0].mxu0
        %v328 = vadd.f32 %v260, %v327
        %v329 = vpop.f32.mrb[0].mxu0
        %330 = vdwg.mxu0
        %v331 = vrot.slane %v328, 4
        %v332 = vmax.f32 %v328, %v331
        %v333 = vrot.slane %v332, 2
        %v334 = vmax.f32 %v332, %v333
        %v335 = vrot.slane %v334, 1
        %v336 = vmax.f32 %v334, %v335
        %v337 = vsub.f32 %v328, %v336
        %v338 = vmul.f32 %v337, 1.442695
        %v339 = vpow.pop %v338
        %v340 = vrot.slane %v339, 4
        %v341 = vadd.f32 %v339, %v340
        %v342 = vrot.slane %v341, 2
        %v343 = vadd.f32 %v341, %v342
        %v344 = vrot.slane %v343, 1
        %v345 = vadd.f32 %v343, %v344
        %v346 = vrcp.pop %v345
        %v347 = vmul.f32 %v339, %v346
        %v348 = vlaneseq
        %v349 = vand.u32 %v348, 127
        %vm350 = vcmp.eq.s32.totalorder %v349, 2
        %v351 = vsel %vm350, %v328, %v347
        %352 = vst [vmem:[%s153] sm:$0xff] %v351
        %p353 = scmp.lt.s32.totalorder %s14, 3
        %s354 = scalar_select %p353, %s14, 3
        %s355 = smul.addr %s354, 8
        %s356 = scalar_lea.vmem %s2, %s355
        // Predicated region
        $region33: #{actor_critic_rollout.1} parent=27 // pred_check
          %p357 = pneg %p79
        $region34: #{actor_critic_rollout.1} parent=27 // pred_check_branch
          %359 = sbr.rel (%p357) target = $region36
        $region35: #{actor_critic_rollout.1} parent=27 // pred_region
          _
        $region36: #{actor_critic_rollout.1} parent=27 // pred_fallthru
          _
      $region28: #{actor_critic_rollout.1} parent=5 // pred_fallthru
        _
      %p360 = scmp.le.s32.totalorder 2, %s9
      // Predicated region
      $region37: #{actor_critic_rollout.1} parent=5 // pred_check
        %p361 = pneg %p360
      $region38: #{actor_critic_rollout.1} parent=5 // pred_check_branch
        %363 = sbr.rel (%p361) target = $region40
      $region39: #{actor_critic_rollout.1} parent=5 // pred_region
        %s364 = ssub.s32 %s9, 2
        // Predicated region
        $region41: #{actor_critic_rollout.1} parent=39 // pred_check
          %p365 = pneg %p85
        $region42: #{actor_critic_rollout.1} parent=39 // pred_check_branch
          %367 = sbr.rel (%p365) target = $region44
        $region43: #{actor_critic_rollout.1} parent=39 // pred_region
          %p368 = scmp.lt.s32.totalorder %s15, 3
          %s369 = scalar_select %p368, %s15, 3
          %s370 = smul.addr %s369, 8
          %s371 = scalar_lea.vmem %s2, %s370
        $region44: #{actor_critic_rollout.1} parent=39 // pred_fallthru
          _
      $region40: #{actor_critic_rollout.1} parent=5 // pred_fallthru
        _
    $region6: #{actor_critic_rollout.1} parent=1 // loop_footer
      %s13 = sadd.s32 1, %s9
    $region7: #{actor_critic_rollout.1} parent=1 // loop_footer_branch
      %8 = sbr.rel target = $region3
    $region8: #{actor_critic_rollout.1} parent=1 // loop_exit
      _
    %372 = vsyncpa [#allocation3], 1
    %s373 = scalar_lea.sflag [#allocation3], 1
    %374 = vsyncpa %s373, 1

</llo_original>
